<compile_context>
chip_gen: v7x
topology: tpu7x:2x2x1
jax: 0.10.0
libtpu: 0.0.40
codegen_flags: <defaults>
</compile_context>

<pallas_src>
import functools

import jax
import jax.numpy as jnp
from jax.experimental import pallas as pl
from jax.experimental.pallas import tpu as pltpu


def _vmem_capacity_bytes():
    """Per-core VMEM capacity; conservative (v7x) fallback if query fails."""
    try:
        info = pltpu.get_tpu_info()
        for attr in ("vmem_capacity_bytes", "vmem_size_bytes"):
            v = getattr(info, attr, None)
            if v:
                return int(v)
    except Exception:
        pass
    return 64 * 1024 * 1024


def _scale_mask_softmax_kernel(x_ref, m_ref, o_ref, *, scale, compute_in_fp32):
    """x_ref / m_ref / o_ref: (1, 1, TILE_SQ, SK) blocks (SK = true key length)."""
    x = x_ref[...]
    if compute_in_fp32 and x.dtype != jnp.float32:
        x = x.astype(jnp.float32)
    if scale is not None:
        x = x * jnp.asarray(scale, x.dtype)

    m = m_ref[...]
    if m.dtype != jnp.bool_:
        m = m != 0
    # TODO(synk): mask_func is hard-coded to Megatron's masked_fill(-10000.0);
    # arbitrary user-provided mask_func callables are not supported in-kernel.
    x = jnp.where(m, jnp.asarray(-10000.0, x.dtype), x)

    # numerically stable softmax over the last (sk) axis; block last dim is the
    # true sk, so no padded lanes can leak into the reduction.
    x = x - jnp.max(x, axis=-1, keepdims=True)
    e = jnp.exp(x)
    if e.dtype == jnp.float32:
        denom = jnp.sum(e, axis=-1, keepdims=True)
    else:
        denom = jnp.sum(e.astype(jnp.float32), axis=-1, keepdims=True)
    inv = pl.reciprocal(denom, approx=True)  # EUP slot, ~free in this kernel
    o_ref[...] = (e * inv).astype(o_ref.dtype)


def _choose_tile_sq(sq, sk, bytes_per_elem, vmem_cap, batch):
    """Pick an sq tile from the per-generation VMEM budget."""
    # Budget for one grid block's working set (double-buffered I/O + fp32 temps).
    budget = min(32 << 20, vmem_cap // 4)           # ~32 MiB on 128 MiB chips, ~16 MiB on v7x
    max_tile = 1024 if vmem_cap >= (96 << 20) else 512
    t = budget // max(1, sk * bytes_per_elem)
    t = max(8, min(t, max_tile))
    if t >= sq:
        tile = sq                                    # single tile == full dim (no 8-alignment needed)
    else:
        tile = max(32, (t // 32) * 32)               # sublane-friendly for fp32/bf16/fp16/int8

    # v7x megacore: with b == 1 make sure the parallel axes have >= 2 blocks.
    if batch == 1 and tile >= sq and sq >= 64:
        half = -(-sq // 2)
        half = ((half + 31) // 32) * 32
        if half < sq:
            tile = half
    return tile
    # TODO(synk): for very long sk (>=16K) add an sk reduction axis with an
    # online-softmax accumulator instead of shrinking TILE_SQ further.


def fused_scale_mask_softmax(x, mask, *, scale=None, softmax_in_fp32=True,
                             tile_sq=None):
    """x: (b, np, sq, sk) fp16/bf16/fp32; mask: (b, 1, sq, sk), nonzero/True = masked."""
    b, n_heads, sq, sk = x.shape
    assert mask.shape == (b, 1, sq, sk), mask.shape
    out_dtype = x.dtype
    compute_in_fp32 = bool(softmax_in_fp32) or x.dtype == jnp.float32

    # Mask ships as-is when it is already 1 byte/elem (bool or int8); only
    # wider masks pay the extra conversion pass.
    if mask.dtype != jnp.bool_ and jnp.dtype(mask.dtype).itemsize != 1:
        mask = mask.astype(jnp.int8)

    x_item = jnp.dtype(x.dtype).itemsize
    m_item = jnp.dtype(mask.dtype).itemsize
    o_item = jnp.dtype(out_dtype).itemsize
    vmem_cap = _vmem_capacity_bytes()

    # Per-element working set: double-buffered x/mask/out tiles plus live
    # compute intermediates (x_f32 + e ~ 8 B/elem when computing in fp32).
    temp_bytes = 8 if compute_in_fp32 else 2 * x_item
    bytes_per_elem = 2 * (x_item + m_item + o_item) + temp_bytes

    if tile_sq is None:
        tile_sq = _choose_tile_sq(sq, sk, bytes_per_elem, vmem_cap, b)
    n_sq_tiles = pl.cdiv(sq, tile_sq)

    kernel = functools.partial(_scale_mask_softmax_kernel, scale=scale,
                               compute_in_fp32=compute_in_fp32)

    blk = (1, 1, tile_sq, sk)
    # x/out blocks follow (batch, sq_tile, head); the mask block ignores the
    # head index (innermost, sequential grid axis), so Pallas skips re-DMAing
    # the same mask tile across consecutive heads.
    x_spec = pl.BlockSpec(blk, lambda bi, si, hi: (bi, hi, si, 0))
    m_spec = pl.BlockSpec(blk, lambda bi, si, hi: (bi, 0, si, 0))
    o_spec = pl.BlockSpec(blk, lambda bi, si, hi: (bi, hi, si, 0))

    footprint = tile_sq * sk * bytes_per_elem + (2 << 20)
    vmem_limit = int(min(int(0.72 * vmem_cap), max(16 << 20, footprint)))

    elems = b * n_heads * sq * sk
    cost = pl.CostEstimate(
        flops=8 * elems,
        transcendentals=elems,
        bytes_accessed=int(elems * (x_item + o_item) + b * sq * sk * m_item),
    )

    return pl.pallas_call(
        kernel,
        out_shape=jax.ShapeDtypeStruct((b, n_heads, sq, sk), out_dtype),
        grid_spec=pltpu.PrefetchScalarGridSpec(
            num_scalar_prefetch=0,
            grid=(b, n_sq_tiles, n_heads),
            in_specs=[x_spec, m_spec],
            out_specs=o_spec,
        ),
        compiler_params=pltpu.CompilerParams(
            # batch & sq-tile axes shard across TensorCores (v7x megacore);
            # heads stay sequential so the mask block is reused across them.
            dimension_semantics=("parallel", "parallel", "arbitrary"),
            vmem_limit_bytes=vmem_limit,
        ),
        cost_estimate=cost,
    )(x, mask)


class NPUFusedScaleMaskSoftmax:
    """JAX/Pallas port of the PyTorch module (forward only)."""

    def __init__(self, input_in_fp16, input_in_bf16, attn_mask_type,
                 scaled_masked_softmax_fusion, mask_func, softmax_in_fp32, scale):
        assert not (input_in_fp16 and input_in_bf16), \
            'both fp16 and bf16 flags cannot be active at the same time.'
        self.input_in_fp16 = input_in_fp16
        self.input_in_bf16 = input_in_bf16
        self.input_in_float16 = input_in_fp16 or input_in_bf16
        self.attn_mask_type = attn_mask_type
        self.scaled_masked_softmax_fusion = scaled_masked_softmax_fusion
        self.mask_func = mask_func  # API parity; kernel hard-codes masked_fill(-10000)
        self.softmax_in_fp32 = softmax_in_fp32
        self.scale = scale
        assert self.scale is None or softmax_in_fp32, \
            'softmax should be in fp32 when scaled'

    def __call__(self, input_, mask):
        assert input_.ndim == 4
        if mask is None:
            # torch-fallback path without a mask: plain scale + softmax.
            x = input_
            orig = x.dtype
            if self.input_in_float16 and self.softmax_in_fp32:
                x = x.astype(jnp.float32)
            if self.scale is not None:
                x = x * self.scale
            p = jax.nn.softmax(x, axis=-1)
            return p.astype(orig)
        return fused_scale_mask_softmax(
            input_, mask, scale=self.scale, softmax_in_fp32=self.softmax_in_fp32)


# ------------------------------ self test --------------------------------

def _reference(x, mask, scale, softmax_in_fp32=True):
    orig_dtype = x.dtype
    if softmax_in_fp32:
        x = x.astype(jnp.float32)
    if scale is not None:
        x = x * scale
    x = jnp.where(mask, -10000.0, x)
    p = jax.nn.softmax(x, axis=-1)
    return p.astype(orig_dtype)


if __name__ == "__main__":
    root_key = jax.random.PRNGKey(0)

    def run_case(key, b, n_heads, sq, sk, dtype, tile_override=None):
        k1, k2 = jax.random.split(key)
        x = jax.random.normal(k1, (b, n_heads, sq, sk), dtype=jnp.float32).astype(dtype)
        # boolean attention mask (True = masked out), shape (b, 1, sq, sk)
        mask = jax.random.bernoulli(k2, p=0.3, shape=(b, 1, sq, sk))
        mask = mask.at[..., 0].set(False)  # keep >=1 unmasked key per row
        scale = 1.0 / (sk ** 0.5)

        if tile_override is None:
            module = NPUFusedScaleMaskSoftmax(
                input_in_fp16=(dtype == jnp.float16),
                input_in_bf16=(dtype == jnp.bfloat16),
                attn_mask_type="padding",
                scaled_masked_softmax_fusion=True,
                mask_func=lambda s, m: jnp.where(m, -10000.0, s),
                softmax_in_fp32=True,
                scale=scale)
            out = module(x, mask)
        else:
            out = fused_scale_mask_softmax(x, mask, scale=scale,
                                           softmax_in_fp32=True,
                                           tile_sq=tile_override)
        out = jax.block_until_ready(out)
        ref = _reference(x, mask, scale, softmax_in_fp32=True)
        assert out.shape == (b, n_heads, sq, sk)
        assert out.dtype == jnp.dtype(dtype)
        err = float(jnp.max(jnp.abs(out.astype(jnp.float32) - ref.astype(jnp.float32))))
        assert err < 2e-2, f"max abs err {err} for {(b, n_heads, sq, sk)}"

    k1, k2, k3 = jax.random.split(root_key, 3)
    # tiny shape: sk < 128 (lane-partial last tile), single full-dim sq tile
    run_case(k1, 2, 4, 16, 32, jnp.bfloat16)
    # non-aligned sk (160) and clipped sq edge block (200 rows, tile 64)
    run_case(k2, 2, 8, 200, 160, jnp.bfloat16, tile_override=64)
    # fp16, aligned shape, b == 1 (exercises megacore sq split)
    run_case(k3, 1, 2, 128, 256, jnp.float16)

    print("KERNEL_OK")
</pallas_src>

<mosaic_0001>
module attributes {stable_mosaic.version = 11 : i64} {
  func.func @_scale_mask_softmax_kernel(%arg0: i32, %arg1: i32, %arg2: i32, %arg3: memref<1x1x16x32xbf16, #tpu.memory_space<vmem>>, %arg4: memref<1x1x16x32xi32, #tpu.memory_space<vmem>>, %arg5: memref<1x1x16x32xbf16, #tpu.memory_space<vmem>>) attributes {dimension_semantics = [#tpu.dimension_semantics<parallel>, #tpu.dimension_semantics<parallel>, #tpu.dimension_semantics<arbitrary>], iteration_bounds = array<i64: 2, 1, 4>, scalar_prefetch = 0 : i64, scratch_operands = 0 : i64, tpu.core_type = #tpu.core_type<tc>, window_params = [{transform_indices = @transform_0, window_bounds = array<i64: 1, 1, 16, 32>}, {transform_indices = @transform_1, window_bounds = array<i64: 1, 1, 16, 32>}, {transform_indices = @transform_2, window_bounds = array<i64: 1, 1, 16, 32>}]} {
    %c0 = arith.constant 0 : index
    %c0_0 = arith.constant 0 : index
    %c0_1 = arith.constant 0 : index
    %c0_2 = arith.constant 0 : index
    %0 = vector.load %arg3[%c0, %c0_0, %c0_1, %c0_2] : memref<1x1x16x32xbf16, #tpu.memory_space<vmem>>, vector<1x1x16x32xbf16>
    %1 = arith.extf %0 : vector<1x1x16x32xbf16> to vector<1x1x16x32xf32>
    %cst = arith.constant 0.176776692 : f32
    %2 = vector.broadcast %cst : f32 to vector<1x1x16x32xf32>
    %3 = arith.mulf %1, %2 : vector<1x1x16x32xf32>
    %c0_3 = arith.constant 0 : index
    %c0_4 = arith.constant 0 : index
    %c0_5 = arith.constant 0 : index
    %c0_6 = arith.constant 0 : index
    %4 = vector.load %arg4[%c0_3, %c0_4, %c0_5, %c0_6] : memref<1x1x16x32xi32, #tpu.memory_space<vmem>>, vector<1x1x16x32xi32>
    %cst_7 = arith.constant dense<0> : vector<1x1x16x32xi32>
    %5 = arith.cmpi ne, %4, %cst_7 : vector<1x1x16x32xi32>
    %cst_8 = arith.constant -1.000000e+04 : f32
    %6 = vector.broadcast %cst_8 : f32 to vector<1x1x16x32xf32>
    %7 = arith.select %5, %6, %3 : vector<1x1x16x32xi1>, vector<1x1x16x32xf32>
    %cst_9 = arith.constant dense<0xFF800000> : vector<1x1x16xf32>
    %8 = vector.multi_reduction <maximumf>, %7, %cst_9 [3] : vector<1x1x16x32xf32> to vector<1x1x16xf32>
    %9 = vector.shape_cast %8 : vector<1x1x16xf32> to vector<1x1x16x1xf32>
    %10 = vector.broadcast %9 : vector<1x1x16x1xf32> to vector<1x1x16x32xf32>
    %11 = arith.subf %7, %10 : vector<1x1x16x32xf32>
    %12 = math.exp %11 : vector<1x1x16x32xf32>
    %cst_10 = arith.constant dense<0.000000e+00> : vector<1x1x16xf32>
    %13 = vector.multi_reduction <add>, %12, %cst_10 [3] : vector<1x1x16x32xf32> to vector<1x1x16xf32>
    %14 = vector.shape_cast %13 : vector<1x1x16xf32> to vector<1x1x16x1xf32>
    %15 = tpu.reciprocal %14 {approx = true} : vector<1x1x16x1xf32> -> vector<1x1x16x1xf32>
    %16 = vector.broadcast %15 : vector<1x1x16x1xf32> to vector<1x1x16x32xf32>
    %17 = arith.mulf %12, %16 : vector<1x1x16x32xf32>
    %18 = arith.truncf %17 : vector<1x1x16x32xf32> to vector<1x1x16x32xbf16>
    %c0_11 = arith.constant 0 : index
    %c0_12 = arith.constant 0 : index
    %c0_13 = arith.constant 0 : index
    %c0_14 = arith.constant 0 : index
    %19 = vector.load %arg5[%c0_11, %c0_12, %c0_13, %c0_14] : memref<1x1x16x32xbf16, #tpu.memory_space<vmem>>, vector<1x1x16x32xbf16>
    tpu.vector_store %arg5[%c0_11, %c0_12, %c0_13, %c0_14], %18 {strides = array<i32>} : memref<1x1x16x32xbf16, #tpu.memory_space<vmem>>, vector<1x1x16x32xbf16>,
    return
  }
  func.func @transform_0(%arg0: i32, %arg1: i32, %arg2: i32) -> (i32, i32, i32, i32) {
    %c0_i32 = arith.constant 0 : i32
    %c0_i32_0 = arith.constant 0 : i32
    return %arg0, %arg2, %arg1, %c0_i32 : i32, i32, i32, i32
  }
  func.func @transform_1(%arg0: i32, %arg1: i32, %arg2: i32) -> (i32, i32, i32, i32) {
    %c0_i32 = arith.constant 0 : i32
    %c0_i32_0 = arith.constant 0 : i32
    %c0_i32_1 = arith.constant 0 : i32
    return %arg0, %c0_i32, %arg1, %c0_i32_0 : i32, i32, i32, i32
  }
  func.func @transform_2(%arg0: i32, %arg1: i32, %arg2: i32) -> (i32, i32, i32, i32) {
    %c0_i32 = arith.constant 0 : i32
    %c0_i32_0 = arith.constant 0 : i32
    return %arg0, %arg2, %arg1, %c0_i32 : i32, i32, i32, i32
  }
}

</mosaic_0001>

<llo_original>
// kernel: tpu_custom_call.1
$region0: #{tpu_custom_call.1}
  #allocation0 [shape = 'u32[]', space=smem, size = 0x4, offset = 0x4, fixed_abs, tag = 'smem constant byte address 0x4 - core index']
  #allocation1 [shape = 'u32[144,128]{1,0:T(1,128)}', space=vmem, size = 0x12000, scoped, tag = 'internal scratch']
  %s0 = inlined_call_operand.hbm [shape: bf16[2,4,16,32], index: 0, kind: input, shape index: {}]
  %s1 = inlined_call_operand.vmem [shape: s32[2,1,16,32], index: 1, kind: input, shape index: {}]
  %s2 = inlined_call_operand.hbm [shape: bf16[2,4,16,32], index: 2, kind: output, shape index: {}]
  %s3 = sld [smem:[#allocation0]]
  $region45: #{tpu_custom_call.1} parent=0
    _
  %s5 = ssub.s32 1, %s3
  %s6 = scalar_select 0, %s5, %s3
  $region1: #{tpu_custom_call.1} parent=0
    #allocation2 [shape = 'u8[8192]{0}', space=vmem, size = 0x2000, scoped, tag = 'input window, operand 0']
    #allocation3 [shape = 's32[2]{0}', space=sflag, size = 0x8, scoped, tag = 'scoped memory for tpu_custom_call.1']
    #allocation4 [shape = 's32[2]{0}', space=sflag, size = 0x8, scoped, tag = 'scoped memory for tpu_custom_call.1']
    #allocation5 [shape = 'u8[8192]{0}', space=vmem, size = 0x2000, scoped, tag = 'output window, operand 0']
    %7 = vsyncpa [#allocation3], 0
    %s8 = scalar_lea.sflag [#allocation3], 1
    %9 = vsyncpa %s8, 0
    %10 = vsyncpa [#allocation4], 0
    %s11 = scalar_lea.sflag [#allocation4], 1
    %12 = vsyncpa %s11, 0
    loop: start=0, step=1, limit=10
    $region2: #{tpu_custom_call.1} parent=1 // loop_pre_header
      _
    $region3: #{tpu_custom_call.1} parent=1 // loop_header
      %s14 = sphi 0, %s18
      %p15 = scmp.ge.s32.totalorder %s14, 10
      %s21 = sphi 0, %s40
      %s22 = sphi 0, %s36
      %s23 = sphi 0, %s32
      %s24 = sphi 0, %s21
      %s25 = sphi 0, %s22
      %s26 = sphi 0, %s23
      %s27 = sphi 0, %s24
      %s28 = sphi 0, %s25
      %s29 = sphi 0, %s26
      %s47 = sphi 0, %s49
      %s50 = sphi 0, %s47
      %s51 = sphi 0, %s50
      %s67 = sphi 0, %s51
      %s75 = sphi 0, %s77
      %s78 = sphi 0, %s75
      %s79 = sphi 0, %s78
      %s95 = sphi 0, %s79
      %s105 = sphi 0, %s107
      %s108 = sphi 0, %s105
      %s109 = sphi 0, %s108
      %s125 = sphi 0, %s109
    $region4: #{tpu_custom_call.1} parent=1 // loop_header_branch
      %17 = sbr.rel (%p15) target = $region8
    $region5: #{tpu_custom_call.1} parent=1 // loop_body
      %s19 = ssub.s32 %s14, 1
      %s20 = ssub.s32 %s14, 2
      %s30 = sadd.s32 1, %s23
      %p31 = scmp.ge.s32.totalorder %s30, 4
      %s32 = scalar_select %p31, 0, %s30
      %s33 = sadd.s32 1, %s22
      %s34 = scalar_select %p31, %s33, %s22
      %p35 = scmp.ge.s32.totalorder %s34, 1
      %s36 = scalar_select %p35, 0, %s34
      %s37 = sadd.s32 1, %s21
      %s38 = scalar_select %p35, %s37, %s21
      %p39 = scmp.ge.s32.totalorder %s38, 2
      %s40 = scalar_select %p39, 0, %s38
      %s41 = ssub.s32 %s21, %s40
      %s42 = ssub.s32 %s23, %s32
      %s43 = sor.u32 %s41, %s42
      %s44 = ssub.s32 %s22, %s36
      %s45 = sor.u32 %s43, %s44
      %p46 = scmp.eq.s32.totalorder %s45, 0
      %s48 = sadd.s32 %s47, 1
      %s49 = scalar_select %p46, %s47, %s48
      %p52 = pneg %p46
      %p53 = scmp.eq.s32.totalorder %s14, 7
      %p54 = por %p52, %p53
      %p55 = scmp.ne.s32.totalorder %s47, %s50
      %p56 = scmp.eq.s32.totalorder %s14, 0
      %p57 = por %p55, %p56
      %p58 = scmp.ne.s32.totalorder %s47, %s50
      %p59 = scmp.eq.s32.totalorder %s19, 7
      %p60 = por %p58, %p59
      %p61 = scmp.ne.s32.totalorder %s50, %s51
      %p62 = scmp.eq.s32.totalorder %s19, 0
      %p63 = por %p61, %p62
      %p64 = scmp.ne.s32.totalorder %s50, %s51
      %p65 = scmp.eq.s32.totalorder %s20, 7
      %p66 = por %p64, %p65
      %p68 = scmp.ne.s32.totalorder %s51, %s67
      %p69 = scmp.eq.s32.totalorder %s20, 0
      %p70 = por %p68, %p69
      %s71 = ssub.s32 %s21, %s40
      %s72 = ssub.s32 %s22, %s36
      %s73 = sor.u32 %s71, %s72
      %p74 = scmp.eq.s32.totalorder %s73, 0
      %s76 = sadd.s32 %s75, 1
      %s77 = scalar_select %p74, %s75, %s76
      %p80 = pneg %p74
      %p81 = scmp.eq.s32.totalorder %s14, 7
      %p82 = por %p80, %p81
      %p83 = scmp.ne.s32.totalorder %s75, %s78
      %p84 = scmp.eq.s32.totalorder %s14, 0
      %p85 = por %p83, %p84
      %p86 = scmp.ne.s32.totalorder %s75, %s78
      %p87 = scmp.eq.s32.totalorder %s19, 7
      %p88 = por %p86, %p87
      %p89 = scmp.ne.s32.totalorder %s78, %s79
      %p90 = scmp.eq.s32.totalorder %s19, 0
      %p91 = por %p89, %p90
      %p92 = scmp.ne.s32.totalorder %s78, %s79
      %p93 = scmp.eq.s32.totalorder %s20, 7
      %p94 = por %p92, %p93
      %p96 = scmp.ne.s32.totalorder %s79, %s95
      %p97 = scmp.eq.s32.totalorder %s20, 0
      %p98 = por %p96, %p97
      %s99 = ssub.s32 %s21, %s40
      %s100 = ssub.s32 %s23, %s32
      %s101 = sor.u32 %s99, %s100
      %s102 = ssub.s32 %s22, %s36
      %s103 = sor.u32 %s101, %s102
      %p104 = scmp.eq.s32.totalorder %s103, 0
      %s106 = sadd.s32 %s105, 1
      %s107 = scalar_select %p104, %s105, %s106
      %p110 = pneg %p104
      %p111 = scmp.eq.s32.totalorder %s14, 7
      %p112 = por %p110, %p111
      %p113 = scmp.ne.s32.totalorder %s105, %s108
      %p114 = scmp.eq.s32.totalorder %s14, 0
      %p115 = por %p113, %p114
      %p116 = scmp.ne.s32.totalorder %s105, %s108
      %p117 = scmp.eq.s32.totalorder %s19, 7
      %p118 = por %p116, %p117
      %p119 = scmp.ne.s32.totalorder %s108, %s109
      %p120 = scmp.eq.s32.totalorder %s19, 0
      %p121 = por %p119, %p120
      %p122 = scmp.ne.s32.totalorder %s108, %s109
      %p123 = scmp.eq.s32.totalorder %s20, 7
      %p124 = por %p122, %p123
      %p126 = scmp.ne.s32.totalorder %s109, %s125
      %p127 = scmp.eq.s32.totalorder %s20, 0
      %p128 = por %p126, %p127
      %p129 = scmp.le.s32.totalorder 1, %s14
      %p130 = scmp.lt.s32.totalorder %s14, 9
      %p131 = pnand %p129, %p130
      %p132 = pneg %p131
      // Predicated region
      $region9: #{tpu_custom_call.1} parent=5 // pred_check
        _
      $region10: #{tpu_custom_call.1} parent=5 // pred_check_branch
        %134 = sbr.rel (%p131) target = $region12
      $region11: #{tpu_custom_call.1} parent=5 // pred_region
        %s135 = ssub.s32 %s14, 1
      $region12: #{tpu_custom_call.1} parent=5 // pred_fallthru
        _
      %p136 = scmp.lt.s32.totalorder %s14, 8
      // Predicated region
      $region13: #{tpu_custom_call.1} parent=5 // pred_check
        %p137 = pneg %p136
      $region14: #{tpu_custom_call.1} parent=5 // pred_check_branch
        %139 = sbr.rel (%p137) target = $region16
      $region15: #{tpu_custom_call.1} parent=5 // pred_region
        // Predicated region
        $region17: #{tpu_custom_call.1} parent=15 // pred_check
          %p140 = pneg %p57
        $region18: #{tpu_custom_call.1} parent=15 // pred_check_branch
          %142 = sbr.rel (%p140) target = $region20
        $region19: #{tpu_custom_call.1} parent=15 // pred_region
          %s143 = sand.u32 %s47, 1
          %s144 = scalar_lea.sflag [#allocation3], %s143
          %s145 = sand.u32 %s47, 1
          %s146 = smul.addr %s145, 8
          %s147 = scalar_lea.vmem [#allocation2], %s146
          %s148 = smul.u32 2, %s22
          %s150 = ssub.s32 128, 128
          %151 = vsyncadd %s144, %s150
          %s152 = smul.addr %s23, 2
          %s153 = sadd.s32 %s148, %s152
          %s154 = smul.addr %s21, 8
          %s155 = sadd.s32 %s153, %s154
          %s156 = smul.addr %s155, 64
          %s157 = scalar_lea.hbm %s0, %s156
          %s158 = sshll.u32 %s147, 4
          %s159 = int_to_ptr.vmem [resolvable:$true] %s158
          %164 = dma.hbm_to_vmem [thread:$0]  %s157, 128, %s159, %s144, 64, 64, 4
        $region20: #{tpu_custom_call.1} parent=15 // pred_fallthru
          _
        // Predicated region
        $region21: #{tpu_custom_call.1} parent=15 // pred_check
          %p165 = pneg %p85
        $region22: #{tpu_custom_call.1} parent=15 // pred_check_branch
          %167 = sbr.rel (%p165) target = $region24
        $region23: #{tpu_custom_call.1} parent=15 // pred_region
          %s168 = smul.u32 2, %s22
          %p169 = scmp.lt.s32.totalorder %s21, 1
          %s170 = scalar_select %p169, %s21, 1
          %p171 = scmp.lt.s32.totalorder %s168, 1
          %s172 = scalar_select %p171, %s168, 1
          %s173 = smul.addr %s170, 2
          %s174 = sadd.s32 %s172, %s173
          %s175 = smul.addr %s174, 8
          %s176 = scalar_lea.vmem %s1, %s175
          %s177 = smul.u32 2, %s22
        $region24: #{tpu_custom_call.1} parent=15 // pred_fallthru
          _
      $region16: #{tpu_custom_call.1} parent=5 // pred_fallthru
        _
      %p178 = scmp.le.s32.totalorder 1, %s14
      %p179 = scmp.lt.s32.totalorder %s14, 9
      %p180 = pnand %p178, %p179
      %p181 = pneg %p180
      // Predicated region
      $region25: #{tpu_custom_call.1} parent=5 // pred_check
        _
      $region26: #{tpu_custom_call.1} parent=5 // pred_check_branch
        %183 = sbr.rel (%p180) target = $region28
      $region27: #{tpu_custom_call.1} parent=5 // pred_region
        %s184 = ssub.s32 %s14, 1
        %s185 = sand.u32 %s50, 1
        %s186 = scalar_lea.sflag [#allocation3], %s185
        %s187 = sand.u32 %s50, 1
        %s188 = smul.addr %s187, 8
        %s189 = scalar_lea.vmem [#allocation2], %s188
        // Predicated region
        $region29: #{tpu_custom_call.1} parent=27 // pred_check
          %p190 = pneg %p63
        $region30: #{tpu_custom_call.1} parent=27 // pred_check_branch
          %192 = sbr.rel (%p190) target = $region32
        $region31: #{tpu_custom_call.1} parent=27 // pred_region
          %193 = dma.done %s186, 128
        $region32: #{tpu_custom_call.1} parent=27 // pred_fallthru
          _
        %s194 = sand.u32 %s50, 1
        %s195 = scalar_lea.sflag [#allocation3], %s194
        %s196 = sand.u32 %s50, 1
        %s197 = smul.addr %s196, 8
        %s198 = scalar_lea.vmem [#allocation2], %s197
        %p199 = pneg %p63
        %p200 = pneg %p60
        %s201 = smul.u32 2, %s25
        %p202 = scmp.lt.s32.totalorder %s24, 1
        %s203 = scalar_select %p202, %s24, 1
        %p204 = scmp.lt.s32.totalorder %s201, 1
        %s205 = scalar_select %p204, %s201, 1
        %s206 = smul.addr %s203, 2
        %s207 = sadd.s32 %s205, %s206
        %s208 = smul.addr %s207, 8
        %s209 = scalar_lea.vmem %s1, %s208
        %p210 = pneg %p91
        %p211 = pneg %p88
        %p212 = pneg %p121
        %p213 = pneg %p118
        %s214 = sand.u32 %s108, 1
        %s215 = scalar_lea.sflag [#allocation4], %s214
        %s216 = sand.u32 %s108, 1
        %s217 = smul.addr %s216, 8
        %s218 = scalar_lea.vmem [#allocation5], %s217
        %s219 = smul.u32 2, %s25
        %s220 = smul.u32 2, %s25
        %p221 = scmp.lt.s32.totalorder %s24, 1
        %s222 = scalar_select %p221, %s24, 1
        %p223 = scmp.lt.s32.totalorder %s220, 1
        %s224 = scalar_select %p223, %s220, 1
        %s225 = smul.addr %s222, 2
        %s226 = sadd.s32 %s224, %s225
        %s227 = smul.addr %s226, 8
        %s228 = scalar_lea.vmem %s1, %s227
        %s229 = smul.u32 2, %s25
        %s230 = smul.u32 2, %s25
        %v231 = vld [vmem:[%s189] sm:$0xf]
        %v232 = vld [vmem:[%s189 + $0x4] sm:$0xf]
        %v233 = vunpack.c.l.bf16 %v231
        %v234 = vunpack.c.l.bf16 %v232
        %v235 = vmul.f32 %v233, 0.17677669
        %v236 = vmul.f32 %v234, 0.17677669
        %v237 = vld [vmem:[%s228] sm:$0xff]
        %v238 = vld [vmem:[%s228 + $0x8] sm:$0xff]
        %vm239 = vcmp.ne.s32.totalorder %v237, 0
        %vm240 = vcmp.ne.s32.totalorder %v238, 0
        %v241 = vsel %vm239, -10000.0, %v235
        %v242 = vsel %vm240, -10000.0, %v236
        %vm243 = vcmask 261120
        %v244 = vsel %vm243, %v241, -inf
        %245 = vmax.xlane.f32.xlu0 %v244
        %v246 = vpop.xlane.xlu0 %245
        %v247 = vsel %vm243, %v242, -inf
        %248 = vmax.xlane.f32.xlu0 %v247
        %v249 = vpop.xlane.xlu0 %248
        %v250 = vsub.f32 %v241, %v246
        %v251 = vsub.f32 %v242, %v249
        %v252 = vmul.f32 %v250, 1.442695
        %v253 = vpow.pop %v252
        %v254 = vmul.f32 %v251, 1.442695
        %v255 = vpow.pop %v254
        %v256 = vsel %vm243, %v253, 0.0
        %257 = vadd.xlane.f32.xlu0 %v256
        %v258 = vpop.xlane.xlu0 %257
        %v259 = vsel %vm243, %v255, 0.0
        %260 = vadd.xlane.f32.xlu0 %v259
        %v261 = vpop.xlane.xlu0 %260
        %v262 = vrcp.pop %v258
        %v263 = vrcp.pop %v261
        %v264 = vmul.f32 %v253, %v262
        %v265 = vmul.f32 %v255, %v263
        %v266 = vpack.c.bf16 %v265, %v264
        %v268 = vunpack.c.l.b16 %v266
        %v269 = vunpack.c.h.b16 %v266
        %v270 = vpack.c.b16 %v268, %v268
        %v271 = vpack.c.b16 %v269, %v269
        %vm274 = vcmask 257024
        %275 = vst.msk [vmem:[%s218] sm:$0xf] %vm274, %v270
        %276 = vst.msk [vmem:[%s218 + $0x4] sm:$0xf] %vm274, %v271
        %s277 = sand.u32 %s108, 1
        %s278 = scalar_lea.sflag [#allocation4], %s277
        %s279 = sand.u32 %s108, 1
        %s280 = smul.addr %s279, 8
        %s281 = scalar_lea.vmem [#allocation5], %s280
        // Predicated region
        $region33: #{tpu_custom_call.1} parent=27 // pred_check
          %p282 = pneg %p118
        $region34: #{tpu_custom_call.1} parent=27 // pred_check_branch
          %284 = sbr.rel (%p282) target = $region36
        $region35: #{tpu_custom_call.1} parent=27 // pred_region
          %s285 = smul.u32 2, %s25
          %s287 = ssub.s32 128, 128
          %288 = vsyncadd %s278, %s287
          %s289 = smul.addr %s26, 2
          %s290 = sadd.s32 %s285, %s289
          %s291 = smul.addr %s24, 8
          %s292 = sadd.s32 %s290, %s291
          %s293 = smul.addr %s292, 64
          %s294 = scalar_lea.hbm %s2, %s293
          %s295 = sshll.u32 %s281, 4
          %s296 = int_to_ptr.vmem [resolvable:$true] %s295
          %301 = dma.vmem_to_hbm [thread:$0]  %s296, 128, %s294, %s278, 64, 64, 4
        $region36: #{tpu_custom_call.1} parent=27 // pred_fallthru
          _
      $region28: #{tpu_custom_call.1} parent=5 // pred_fallthru
        _
      %p302 = scmp.le.s32.totalorder 2, %s14
      // Predicated region
      $region37: #{tpu_custom_call.1} parent=5 // pred_check
        %p303 = pneg %p302
      $region38: #{tpu_custom_call.1} parent=5 // pred_check_branch
        %305 = sbr.rel (%p303) target = $region40
      $region39: #{tpu_custom_call.1} parent=5 // pred_region
        %s306 = ssub.s32 %s14, 2
        // Predicated region
        $region41: #{tpu_custom_call.1} parent=39 // pred_check
          %p307 = pneg %p124
        $region42: #{tpu_custom_call.1} parent=39 // pred_check_branch
          %309 = sbr.rel (%p307) target = $region44
        $region43: #{tpu_custom_call.1} parent=39 // pred_region
          %s310 = sand.u32 %s109, 1
          %s311 = scalar_lea.sflag [#allocation4], %s310
          %s312 = sand.u32 %s109, 1
          %s313 = smul.addr %s312, 8
          %s314 = scalar_lea.vmem [#allocation5], %s313
          %315 = dma.done %s311, 128
        $region44: #{tpu_custom_call.1} parent=39 // pred_fallthru
          _
      $region40: #{tpu_custom_call.1} parent=5 // pred_fallthru
        _
    $region6: #{tpu_custom_call.1} parent=1 // loop_footer
      %s18 = sadd.s32 1, %s14
    $region7: #{tpu_custom_call.1} parent=1 // loop_footer_branch
      %13 = sbr.rel target = $region3
    $region8: #{tpu_custom_call.1} parent=1 // loop_exit
      _
    %316 = vsyncpa [#allocation3], 1
    %s317 = scalar_lea.sflag [#allocation3], 1
    %318 = vsyncpa %s317, 1
    %319 = vsyncpa [#allocation4], 1
    %s320 = scalar_lea.sflag [#allocation4], 1
    %321 = vsyncpa %s320, 1

</llo_original>
